<compile_context>
chip_gen: v5e
topology: v5e:2x2
jax: 0.10.0
libtpu: 0.0.40
codegen_flags: <defaults>
</compile_context>

<pallas_src>
import jax
import jax.numpy as jnp
from jax.experimental import pallas as pl
from jax.experimental.pallas import tpu as pltpu


def _patch_embed_kernel(x_ref, w_ref, b_ref, o_ref):
    # x_ref: (TM, K) patch tile, w_ref: (K, Dp) projection (resident),
    # b_ref: (1, Dp) f32 bias, o_ref: (TM, Dp) output tile.
    acc = jnp.dot(x_ref[...], w_ref[...], preferred_element_type=jnp.float32)
    o_ref[...] = (acc + b_ref[...]).astype(o_ref.dtype)


def patch_embedding(x, weight, bias, patch_size, *, block_m=512,
                    compute_dtype=jnp.bfloat16, out_dtype=None):
    """Forward pass of PatchEmbedding.

    Args:
      x:      (B, C, H, W) image batch (NCHW, like PyTorch).
      weight: (D, C, P, P) conv filters (PyTorch Conv2d weight layout).
      bias:   (D,) conv bias.
      patch_size: P (== conv kernel size == stride).
      block_m: M-tile size (rows of the patch matrix per grid step).
      compute_dtype: dtype fed to the MXU (bf16 by default; accumulate is f32).
      out_dtype: output dtype (defaults to x.dtype).

    Returns:
      (B, N, D) patch embeddings, N = (H/P)*(W/P).
    """
    B, C, H, W = x.shape
    D = weight.shape[0]
    P = patch_size
    assert H % P == 0 and W % P == 0, "image size must be divisible by patch size"
    Hp, Wp = H // P, W // P
    N = Hp * Wp
    K = C * P * P
    M = B * N
    out_dtype = x.dtype if out_dtype is None else out_dtype

    # Patch extraction: one XLA transpose pass NCHW -> (M, K).
    # TODO(synk): fuse extraction into the kernel (memory_space=pl.ANY +
    # per-(C,P,W)-strip make_async_copy) for P >= 8 to remove this HBM pass.
    patches = x.reshape(B, C, Hp, P, Wp, P).transpose(0, 2, 4, 1, 3, 5)
    patches = patches.reshape(M, K)
    w_mat = weight.reshape(D, K).T                           # (K, D)

    # Pad D up to a lane-dense multiple of 128 (unmasked output stores).
    Dp = ((D + 127) // 128) * 128
    if Dp != D:
        w_mat = jnp.pad(w_mat, ((0, 0), (0, Dp - D)))
        b_vec = jnp.pad(bias, (0, Dp - D))
    else:
        b_vec = bias
    b_mat = b_vec.reshape(1, Dp).astype(jnp.float32)

    # Feed the MXU low-precision operands; bias/accumulate stay f32.
    patches = patches.astype(compute_dtype)
    w_mat = w_mat.astype(compute_dtype)

    # M-tile: keep it a multiple of 8 (sublane) and VMEM-friendly on v7x.
    tm = block_m if M > block_m else max(8, ((M + 7) // 8) * 8)
    grid_m = pl.cdiv(M, tm)

    in_bytes = (M * K * patches.dtype.itemsize
                + K * Dp * w_mat.dtype.itemsize
                + Dp * 4)
    out_bytes = M * Dp * jnp.dtype(out_dtype).itemsize
    cost = pl.CostEstimate(flops=2 * M * K * Dp, transcendentals=0,
                           bytes_accessed=in_bytes + out_bytes)

    out = pl.pallas_call(
        _patch_embed_kernel,
        out_shape=jax.ShapeDtypeStruct((M, Dp), out_dtype),
        grid=(grid_m,),
        in_specs=[
            pl.BlockSpec((tm, K), lambda i: (i, 0)),    # patch tile (pipelined)
            pl.BlockSpec((K, Dp), lambda i: (0, 0)),    # weight, resident
            pl.BlockSpec((1, Dp), lambda i: (0, 0)),    # bias, resident
        ],
        out_specs=pl.BlockSpec((tm, Dp), lambda i: (i, 0)),
        compiler_params=pltpu.CompilerParams(
            dimension_semantics=("parallel",)),         # megacore on v7x
        cost_estimate=cost,
    )(patches, w_mat, b_mat)

    if Dp != D:
        out = out[:, :D]
    return out.reshape(B, N, D)


def reference_patch_embedding(x, weight, bias, patch_size):
    """Pure-JAX reference (conv via lax.conv_general_dilated)."""
    y = jax.lax.conv_general_dilated(
        x, weight,
        window_strides=(patch_size, patch_size),
        padding="VALID",
        dimension_numbers=("NCHW", "OIHW", "NCHW"),
    ) + bias.reshape(1, -1, 1, 1)
    B, D, Hp, Wp = y.shape
    return y.reshape(B, D, Hp * Wp).transpose(0, 2, 1)


if __name__ == "__main__":
    # Small shapes consistent with the module's forward.
    batch_size = 2
    n_channels = 4
    img_size = 16
    patch_size = 4
    n_model = 32  # = P * P * C in the ViT convention

    key = jax.random.PRNGKey(0)
    kx, kw, kb = jax.random.split(key, 3)

    x = jax.random.normal(kx, (batch_size, n_channels, img_size, img_size),
                          dtype=jnp.float32)
    weight = jax.random.normal(
        kw, (n_model, n_channels, patch_size, patch_size), dtype=jnp.float32
    ) * 0.02
    bias = jax.random.normal(kb, (n_model,), dtype=jnp.float32) * 0.02

    ref = reference_patch_embedding(x, weight, bias, patch_size)
    n_patches = (img_size // patch_size) ** 2

    # f32 compute path: exact match against the conv reference.
    out_f32 = patch_embedding(x, weight, bias, patch_size,
                              compute_dtype=jnp.float32)
    out_f32 = jax.block_until_ready(out_f32)
    assert out_f32.shape == (batch_size, n_patches, n_model)
    assert jnp.allclose(out_f32, ref, atol=1e-5, rtol=1e-5), "f32 mismatch"

    # Default bf16-operand path (production config): loose tolerance.
    out_bf16 = patch_embedding(x, weight, bias, patch_size)
    out_bf16 = jax.block_until_ready(out_bf16)
    assert out_bf16.shape == (batch_size, n_patches, n_model)
    assert jnp.allclose(out_bf16.astype(jnp.float32), ref,
                        atol=2e-2, rtol=2e-2), "bf16 mismatch"

    print("KERNEL_OK")
</pallas_src>

<mosaic_0001>
module attributes {stable_mosaic.version = 11 : i64} {
  func.func @_patch_embed_kernel(%arg0: i32, %arg1: memref<32x64xf32, #tpu.memory_space<vmem>>, %arg2: memref<64x128xf32, #tpu.memory_space<vmem>>, %arg3: memref<1x128xf32, #tpu.memory_space<vmem>>, %arg4: memref<32x128xf32, #tpu.memory_space<vmem>>) attributes {dimension_semantics = [#tpu.dimension_semantics<parallel>], iteration_bounds = array<i64: 1>, scalar_prefetch = 0 : i64, scratch_operands = 0 : i64, tpu.core_type = #tpu.core_type<tc>, window_params = [{transform_indices = @transform_0, window_bounds = array<i64: 32, 64>}, {pipeline_mode = #tpu.pipeline_mode<synchronous>, transform_indices = @transform_1, window_bounds = array<i64: 64, 128>}, {pipeline_mode = #tpu.pipeline_mode<synchronous>, transform_indices = @transform_2, window_bounds = array<i64: 1, 128>}, {transform_indices = @transform_3, window_bounds = array<i64: 32, 128>}]} {
    %c0 = arith.constant 0 : index
    %c0_0 = arith.constant 0 : index
    %0 = vector.load %arg1[%c0, %c0_0] : memref<32x64xf32, #tpu.memory_space<vmem>>, vector<32x64xf32>
    %c0_1 = arith.constant 0 : index
    %c0_2 = arith.constant 0 : index
    %1 = vector.load %arg2[%c0_1, %c0_2] : memref<64x128xf32, #tpu.memory_space<vmem>>, vector<64x128xf32>
    %cst = arith.constant dense<0.000000e+00> : vector<32x128xf32>
    %2 = tpu.matmul %0, %1, %cst {dimension_numbers = #tpu.dot_dimension_numbers<[1], [0], [0], [1], [0, 0, 1, 1], [], []>} : vector<32x64xf32>, vector<64x128xf32>, vector<32x128xf32> -> vector<32x128xf32>
    %c0_3 = arith.constant 0 : index
    %c0_4 = arith.constant 0 : index
    %3 = vector.load %arg3[%c0_3, %c0_4] : memref<1x128xf32, #tpu.memory_space<vmem>>, vector<1x128xf32>
    %4 = vector.broadcast %3 : vector<1x128xf32> to vector<32x128xf32>
    %5 = arith.addf %2, %4 : vector<32x128xf32>
    %c0_5 = arith.constant 0 : index
    %c0_6 = arith.constant 0 : index
    %6 = vector.load %arg4[%c0_5, %c0_6] : memref<32x128xf32, #tpu.memory_space<vmem>>, vector<32x128xf32>
    tpu.vector_store %arg4[%c0_5, %c0_6], %5 {strides = array<i32>} : memref<32x128xf32, #tpu.memory_space<vmem>>, vector<32x128xf32>,
    return
  }
  func.func @transform_0(%arg0: i32) -> (i32, i32) {
    %c0_i32 = arith.constant 0 : i32
    %c0_i32_0 = arith.constant 0 : i32
    return %arg0, %c0_i32 : i32, i32
  }
  func.func @transform_1(%arg0: i32) -> (i32, i32) {
    %c0_i32 = arith.constant 0 : i32
    %c0_i32_0 = arith.constant 0 : i32
    %c0_i32_1 = arith.constant 0 : i32
    return %c0_i32, %c0_i32_0 : i32, i32
  }
  func.func @transform_2(%arg0: i32) -> (i32, i32) {
    %c0_i32 = arith.constant 0 : i32
    %c0_i32_0 = arith.constant 0 : i32
    %c0_i32_1 = arith.constant 0 : i32
    return %c0_i32, %c0_i32_0 : i32, i32
  }
  func.func @transform_3(%arg0: i32) -> (i32, i32) {
    %c0_i32 = arith.constant 0 : i32
    %c0_i32_0 = arith.constant 0 : i32
    return %arg0, %c0_i32 : i32, i32
  }
}

</mosaic_0001>

<llo_original>
// kernel: tpu_custom_call.1
$region0: #{tpu_custom_call.1}
  #allocation0 [shape = 'u32[]', space=smem, size = 0x4, offset = 0x4, fixed_abs, tag = 'smem constant byte address 0x4 - core index']
  #allocation1 [shape = 'u32[72,128]{1,0:T(1,128)}', space=vmem, size = 0x9000, scoped, tag = 'internal scratch']
  %s0 = inlined_call_operand.hbm [shape: f32[32,64], index: 0, kind: input, shape index: {}]
  %s1 = inlined_call_operand.hbm [shape: f32[64,128], index: 1, kind: input, shape index: {}]
  %s2 = inlined_call_operand.vmem [shape: f32[1,128], index: 2, kind: input, shape index: {}]
  %s3 = inlined_call_operand.hbm [shape: f32[32,128], index: 3, kind: output, shape index: {}]
  %s4 = sld [smem:[#allocation0]]
  $region30: #{tpu_custom_call.1} parent=0
    _
  %s6 = ssub.s32 1, %s4
  %s7 = scalar_select 0, %s6, %s4
  $region1: #{tpu_custom_call.1} parent=0
    #allocation2 [shape = 'u8[16384]{0}', space=vmem, size = 0x4000, scoped, tag = 'input window, operand 0, single buffered']
    #allocation3 [shape = 's32[1]{0}', space=sflag, size = 0x4, scoped, tag = 'scoped memory for tpu_custom_call.1']
    #allocation4 [shape = 's32[1]{0}', space=sflag, size = 0x4, scoped, tag = 'scoped memory for tpu_custom_call.1']
    #allocation5 [shape = 'u8[32768]{0}', space=vmem, size = 0x8000, scoped, tag = 'input window, operand 1, single buffered']
    #allocation6 [shape = 's32[1]{0}', space=sflag, size = 0x4, scoped, tag = 'scoped memory for tpu_custom_call.1']
    #allocation7 [shape = 'u8[16384]{0}', space=vmem, size = 0x4000, scoped, tag = 'output window, operand 0, single buffered']
    %8 = vsyncpa [#allocation3], 0
    %9 = vsyncpa [#allocation6], 0
    %10 = vsyncpa [#allocation4], 0
    // Predicated region
    $region2: #{tpu_custom_call.1} parent=1 // pred_check
      _
    $region3: #{tpu_custom_call.1} parent=1 // pred_check_branch
      %12 = sbr.rel (0) target = $region5
    $region4: #{tpu_custom_call.1} parent=1 // pred_region
      %14 = vsyncadd [#allocation3], 0
      %s15 = sshll.u32 %s0, 4
      %s16 = int_to_ptr.hbm [resolvable:$true] %s15
      %s17 = sshll.u32 [#allocation2], 4
      %s18 = int_to_ptr.vmem [resolvable:$true] %s17
      %23 = dma.hbm_to_vmem [thread:$0]  %s16, 512, %s18, [#allocation3], 128, 128, 8
    $region5: #{tpu_custom_call.1} parent=1 // pred_fallthru
      _
    // Predicated region
    $region6: #{tpu_custom_call.1} parent=1 // pred_check
      _
    $region7: #{tpu_custom_call.1} parent=1 // pred_check_branch
      %25 = sbr.rel (0) target = $region9
    $region8: #{tpu_custom_call.1} parent=1 // pred_region
      %27 = vsyncadd [#allocation6], 0
      %s28 = sshll.u32 %s1, 4
      %s29 = int_to_ptr.hbm [resolvable:$true] %s28
      %s30 = sshll.u32 [#allocation5], 4
      %s31 = int_to_ptr.vmem [resolvable:$true] %s30
      %36 = dma.hbm_to_vmem [thread:$0]  %s29, 1024, %s31, [#allocation6], 128, 128, 8
    $region9: #{tpu_custom_call.1} parent=1 // pred_fallthru
      _
    // Predicated region
    $region10: #{tpu_custom_call.1} parent=1 // pred_check
      _
    $region11: #{tpu_custom_call.1} parent=1 // pred_check_branch
      %38 = sbr.rel (0) target = $region13
    $region12: #{tpu_custom_call.1} parent=1 // pred_region
      _
    $region13: #{tpu_custom_call.1} parent=1 // pred_fallthru
      _
    // Predicated region
    $region14: #{tpu_custom_call.1} parent=1 // pred_check
      _
    $region15: #{tpu_custom_call.1} parent=1 // pred_check_branch
      %40 = sbr.rel (0) target = $region17
    $region16: #{tpu_custom_call.1} parent=1 // pred_region
      %42 = dma.done [#allocation3], 512
    $region17: #{tpu_custom_call.1} parent=1 // pred_fallthru
      _
    // Predicated region
    $region18: #{tpu_custom_call.1} parent=1 // pred_check
      _
    $region19: #{tpu_custom_call.1} parent=1 // pred_check_branch
      %44 = sbr.rel (0) target = $region21
    $region20: #{tpu_custom_call.1} parent=1 // pred_region
      %46 = dma.done [#allocation6], 1024
    $region21: #{tpu_custom_call.1} parent=1 // pred_fallthru
      _
    %v47 = vld [vmem:[#allocation2] sm:$0xff]
    %v48 = vld [vmem:[#allocation2 + $0x8] sm:$0xff]
    %v49 = vld [vmem:[#allocation2 + $0x10] sm:$0xff]
    %v50 = vld [vmem:[#allocation2 + $0x18] sm:$0xff]
    %v51 = vld [vmem:[#allocation5] sm:$0xff]
    %v52 = vld [vmem:[#allocation5 + $0x8] sm:$0xff]
    %v53 = vld [vmem:[#allocation5 + $0x10] sm:$0xff]
    %v54 = vld [vmem:[#allocation5 + $0x18] sm:$0xff]
    %v55 = vld [vmem:[#allocation5 + $0x20] sm:$0xff]
    %v56 = vld [vmem:[#allocation5 + $0x28] sm:$0xff]
    %v57 = vld [vmem:[#allocation5 + $0x30] sm:$0xff]
    %v58 = vld [vmem:[#allocation5 + $0x38] sm:$0xff]
    %v59 = vld [vmem:[%s2] sm:$0x1]
    %v61 = vperm.slane %v59, 0
    %vm63 = vcmask 523264
    %v65 = vsel %vm63, %v47, 0
    %v68 = vsel %vm63, %v48, 0
    %v71 = vsel %vm63, %v49, 0
    %v74 = vsel %vm63, %v50, 0
    %76 = vmatpush.msra.mxu0 0.0
    %77 = vmatpush.msra.mxu0 0.0
    %78 = vmatpush.msra.mxu0 0.0
    %79 = vmatpush.msra.mxu0 0.0
    %80 = vmatpush.msra.mxu0 0.0
    %81 = vmatpush.msra.mxu0 0.0
    %82 = vmatpush.msra.mxu0 0.0
    %83 = vmatpush.msra.mxu0 0.0
    %84 = vmatpush.msra.mxu0 %v58
    %85 = vmatpush.msra.mxu0 %v57
    %86 = vmatpush.msra.mxu0 %v56
    %87 = vmatpush.msra.mxu0 %v55
    %88 = vmatpush.msra.mxu0 %v54
    %89 = vmatpush.msra.mxu0 %v53
    %90 = vmatpush.msra.mxu0 %v52
    %91 = vmatpush.msra.mxu0 %v51
    %92 = vmatmul.f32.gmra.mxu0 %v65
    %v93 = vpop.f32.mrf.mxu0
    %v94 = vadd.f32 %v61, %v93
    %95 = vmatmul.f32.gmra.mxu0 %v68
    %v96 = vpop.f32.mrf.mxu0
    %v97 = vadd.f32 %v61, %v96
    %98 = vmatmul.f32.gmra.mxu0 %v71
    %v99 = vpop.f32.mrf.mxu0
    %v100 = vadd.f32 %v61, %v99
    %101 = vmatmul.f32.gmra.mxu0 %v74
    %v102 = vpop.f32.mrf.mxu0
    %v103 = vadd.f32 %v61, %v102
    %104 = vdwg.mxu0
    %105 = vst [vmem:[#allocation7] sm:$0xff] %v94
    %106 = vst [vmem:[#allocation7 + $0x8] sm:$0xff] %v97
    %107 = vst [vmem:[#allocation7 + $0x10] sm:$0xff] %v100
    %108 = vst [vmem:[#allocation7 + $0x18] sm:$0xff] %v103
    // Predicated region
    $region22: #{tpu_custom_call.1} parent=1 // pred_check
      _
    $region23: #{tpu_custom_call.1} parent=1 // pred_check_branch
      %110 = sbr.rel (0) target = $region25
    $region24: #{tpu_custom_call.1} parent=1 // pred_region
      %112 = vsyncadd [#allocation4], 0
      %s113 = sshll.u32 [#allocation7], 4
      %s114 = int_to_ptr.vmem [resolvable:$true] %s113
      %s115 = sshll.u32 %s3, 4
      %s116 = int_to_ptr.hbm [resolvable:$true] %s115
      %121 = dma.vmem_to_hbm [thread:$0]  %s114, 512, %s116, [#allocation4], 128, 128, 8
    $region25: #{tpu_custom_call.1} parent=1 // pred_fallthru
      _
    // Predicated region
    $region26: #{tpu_custom_call.1} parent=1 // pred_check
      _
    $region27: #{tpu_custom_call.1} parent=1 // pred_check_branch
      %123 = sbr.rel (0) target = $region29
    $region28: #{tpu_custom_call.1} parent=1 // pred_region
      %125 = dma.done [#allocation4], 512
    $region29: #{tpu_custom_call.1} parent=1 // pred_fallthru
      _
    %126 = vsyncpa [#allocation3], 1
    %127 = vsyncpa [#allocation6], 1
    %128 = vsyncpa [#allocation4], 1

</llo_original>
